<compile_context>
chip_gen: v7x
topology: tpu7x:2x2x1
jax: 0.10.0
libtpu: 0.0.40
codegen_flags: <defaults>
</compile_context>

<pallas_src>
import functools

import numpy as np
import jax
import jax.numpy as jnp
from jax.experimental import pallas as pl
from jax.experimental.pallas import tpu as pltpu


# ----------------------------------------------------------------------------
# Quadrature weights (Clenshaw-Curtis latitude weights for the 'equiangular'
# grid, scaled by 2*pi/nlon and normalized) — matches get_quadrature_weights.
# ----------------------------------------------------------------------------
def _clenshaw_curtis_weights(n: int) -> np.ndarray:
    j = np.arange(n)
    theta = np.pi * j / (n - 1)
    K = (n - 1) // 2
    w = np.zeros(n, dtype=np.float64)
    for jj in range(n):
        s = 0.0
        for k in range(1, K + 1):
            b = 1.0 if (2 * k) == (n - 1) else 2.0
            s += b / (4 * k * k - 1) * np.cos(2 * k * theta[jj])
        c = 1.0 if jj in (0, n - 1) else 2.0
        w[jj] = c / (n - 1) * (1.0 - s)
    return w


def get_quadrature_weights(nlat: int, nlon: int, grid: str = "equiangular") -> jnp.ndarray:
    w = _clenshaw_curtis_weights(nlat)
    q = w.reshape(-1, 1) * 2.0 * np.pi / nlon
    q = q / q.sum() / float(nlon)               # normalized=True
    return jnp.asarray(q, dtype=jnp.float32)    # shape (nlat, 1)


# ----------------------------------------------------------------------------
# Pallas kernel: per-(batch, lat-tile) partial intersection / union per class.
# ----------------------------------------------------------------------------
def _dice_partial_kernel(prd_ref, tar_ref, quad_ref, inter_ref, union_ref, *,
                         num_classes: int, ignore_index, nlat: int,
                         tile_lat: int, ragged: bool):
    # prd_ref: (1, C, TL, nlon)  tar_ref: (1, TL, nlon)  quad_ref: (TL, 1)
    # inter_ref / union_ref: (1, 1, 1, C)
    C = num_classes
    TL = tile_lat
    nlon = tar_ref.shape[-1]
    f32 = jnp.float32

    tar = tar_ref[0]                                       # (TL, nlon) int32

    # ---- validity masks: ragged last latitude tile + ignore_index ----------
    if ragged:
        row0 = pl.program_id(1) * TL
        in_rows = (jax.lax.broadcasted_iota(jnp.int32, (TL, nlon), 0) + row0) < nlat
        q_rows = (jax.lax.broadcasted_iota(jnp.int32, (TL, 1), 0) + row0) < nlat
        # OOB quad rows may hold garbage -> force exactly 0 (select, not multiply)
        q = jnp.where(q_rows, quad_ref[...], 0.0)          # (TL, 1)
    else:
        in_rows = None
        q = quad_ref[...]                                  # (TL, 1)

    if ignore_index is not None:
        not_ign = tar != ignore_index
        valid = not_ign if in_rows is None else (not_ign & in_rows)
        tar_oh = jnp.where(not_ign, tar, 0)   # ignored -> class 0 one-hot (torch semantics)
    else:
        valid = in_rows
        tar_oh = tar
    if in_rows is not None:
        tar_oh = jnp.where(in_rows, tar_oh, -1)            # OOB rows match no class

    # ---- channel softmax: two streaming passes, no (C, TL, nlon) buffer ----
    m = prd_ref[0, 0].astype(f32)                          # (TL, nlon)
    for c in range(1, C):
        m = jnp.maximum(m, prd_ref[0, c].astype(f32))
    s = jnp.exp(prd_ref[0, 0].astype(f32) - m)
    for c in range(1, C):
        s = s + jnp.exp(prd_ref[0, c].astype(f32) - m)
    lse = m + jnp.log(s)                                   # p_c = exp(x_c - lse)

    # ---- per-class lane reductions, batched into (TL, C) columns -----------
    lane = jax.lax.broadcasted_iota(jnp.int32, (TL, C), 1)
    inter_mat = jnp.zeros((TL, C), f32)
    union_mat = jnp.zeros((TL, C), f32)
    for c in range(C):
        p_c = jnp.exp(prd_ref[0, c].astype(f32) - lse)     # (TL, nlon)
        if valid is not None:
            # select (not multiply) so NaN/Inf in OOB rows cannot leak through
            p_c = jnp.where(valid, p_c, 0.0)
        oh_m = tar_oh == c                                  # bool mask
        oh_f = jnp.where(oh_m, 1.0, 0.0)
        inter_col = jnp.sum(jnp.where(oh_m, p_c, 0.0), axis=-1, keepdims=True)  # (TL,1)
        union_col = jnp.sum(p_c + oh_f, axis=-1, keepdims=True)                 # (TL,1)
        inter_mat = jnp.where(lane == c, inter_col, inter_mat)
        union_mat = jnp.where(lane == c, union_col, union_mat)

    # single quadrature multiply + one sublane reduce per output, lane-dense store
    inter_ref[...] = jnp.sum(inter_mat * q, axis=0, keepdims=True).reshape(1, 1, 1, C)
    union_ref[...] = jnp.sum(union_mat * q, axis=0, keepdims=True).reshape(1, 1, 1, C)


# ----------------------------------------------------------------------------
# Wrapper
# ----------------------------------------------------------------------------
def _round_up(x: int, m: int) -> int:
    return ((x + m - 1) // m) * m


def _cdiv(a: int, b: int) -> int:
    return -(-a // b)


def _vmem_capacity_bytes(default: int = 64 * 1024 * 1024) -> int:
    try:
        info = pltpu.get_tpu_info()
        cap = getattr(info, "vmem_capacity_bytes", None)
        if cap:
            return int(cap)
    except Exception:
        pass
    return default


def dice_loss_s2(prd, tar, quad_weights, *, smooth: float = 0.0,
                 ignore_index=-100, mode: str = "micro", weight=None,
                 tile_lat=None):
    """Forward pass of DiceLossS2 (softmax dice with quadrature weights)."""
    B, C, nlat, nlon = prd.shape
    assert tar.shape == (B, nlat, nlon)
    assert quad_weights.shape == (nlat, 1)

    tar = tar.astype(jnp.int32)
    quad_weights = quad_weights.astype(jnp.float32)
    # prd keeps its native dtype (f32 or bf16); planes are upcast in-kernel.

    itemsize = jnp.dtype(prd.dtype).itemsize
    sub = 8 * max(1, 4 // itemsize)        # sublane multiple: 8 (f32), 16 (bf16)
    vmem_cap = _vmem_capacity_bytes()

    if tile_lat is not None:
        TL = max(sub, (int(tile_lat) // sub) * sub)
        TL = min(TL, _round_up(nlat, sub))
    else:
        # Size the latitude tile from the per-generation VMEM budget.
        budget = int(vmem_cap * 0.6)
        per_row = (2 * C * nlon * itemsize      # double-buffered prd block
                   + 2 * nlon * 4               # double-buffered tar block
                   + 10 * nlon * 4)             # live f32 row intermediates
        TL = max(sub, (budget // max(per_row, 1) // sub) * sub)
        TL = min(TL, 512, _round_up(nlat, sub))

    n_tiles = _cdiv(nlat, TL)
    # v7x has 2 TensorCores: prefer an even grid so the parallel axes split cleanly.
    if tile_lat is None and (B * n_tiles) % 2 == 1 and nlat > sub:
        t = TL
        while t > sub and (B * _cdiv(nlat, t)) % 2 == 1:
            t -= sub
        if (B * _cdiv(nlat, t)) % 2 == 0:
            TL = t
            n_tiles = _cdiv(nlat, TL)
    ragged = (n_tiles * TL) != nlat

    kernel = functools.partial(_dice_partial_kernel, num_classes=C,
                               ignore_index=ignore_index, nlat=nlat,
                               tile_lat=TL, ragged=ragged)

    inter_p, union_p = pl.pallas_call(
        kernel,
        out_shape=(jax.ShapeDtypeStruct((B, n_tiles, 1, C), jnp.float32),
                   jax.ShapeDtypeStruct((B, n_tiles, 1, C), jnp.float32)),
        grid=(B, n_tiles),
        in_specs=[
            pl.BlockSpec((1, C, TL, nlon), lambda b, t: (b, 0, t, 0)),
            pl.BlockSpec((1, TL, nlon), lambda b, t: (b, t, 0)),
            pl.BlockSpec((TL, 1), lambda b, t: (t, 0)),
        ],
        out_specs=(pl.BlockSpec((1, 1, 1, C), lambda b, t: (b, t, 0, 0)),
                   pl.BlockSpec((1, 1, 1, C), lambda b, t: (b, t, 0, 0))),
        compiler_params=pltpu.CompilerParams(
            dimension_semantics=("parallel", "parallel"),
            vmem_limit_bytes=int(vmem_cap * 0.75)),
    )(prd, tar, quad_weights)

    intersection = jnp.sum(inter_p[:, :, 0, :], axis=1)   # (B, C)
    union = jnp.sum(union_p[:, :, 0, :], axis=1)          # (B, C)

    # Tiny (B, C) epilogue in plain JAX (mode / per-class weight / final mean).
    smooth = jnp.float32(smooth)
    if mode == "micro":
        if weight is not None:
            w = jnp.asarray(weight, jnp.float32).reshape(1, C)
            I = jnp.sum(intersection * w, axis=1)
            U = jnp.sum(union * w, axis=1)
        else:
            I = jnp.mean(intersection, axis=1)
            U = jnp.mean(union, axis=1)
        dice = (2.0 * I + smooth) / (U + smooth)
    elif mode == "macro":
        dice = (2.0 * intersection + smooth) / (union + smooth)
        if weight is not None:
            w = jnp.asarray(weight, jnp.float32).reshape(1, C)
            dice = jnp.sum(dice * w, axis=1)
        else:
            dice = jnp.mean(dice, axis=1)
    else:
        raise ValueError(f"unknown mode: {mode}")
    return 1.0 - jnp.mean(dice)


# ----------------------------------------------------------------------------
# Pure-JAX reference (mirrors the PyTorch forward exactly) for validation.
# ----------------------------------------------------------------------------
def _reference(prd, tar, quad, smooth, ignore_index, mode="micro", weight=None):
    C = prd.shape[1]
    p = jax.nn.softmax(prd.astype(jnp.float32), axis=1)
    mask = (tar != ignore_index).astype(jnp.int32)
    p = p * mask[:, None, :, :].astype(jnp.float32)
    tar_m = tar * mask
    taroh = (tar_m[:, None, :, :] ==
             jnp.arange(C)[None, :, None, None]).astype(jnp.float32)
    qb = quad[None, None, :, :]
    inter = jnp.sum(p * taroh * qb, axis=(-2, -1))
    union = jnp.sum((p + taroh) * qb, axis=(-2, -1))
    if mode == "micro":
        if weight is not None:
            inter = jnp.sum(inter * weight[None, :], axis=1)
            union = jnp.sum(union * weight[None, :], axis=1)
        else:
            inter = jnp.mean(inter, axis=1)
            union = jnp.mean(union, axis=1)
    dice = (2.0 * inter + smooth) / (union + smooth)
    if mode == "macro":
        if weight is not None:
            dice = jnp.sum(dice * weight[None, :], axis=1)
        else:
            dice = jnp.mean(dice, axis=1)
    return 1.0 - jnp.mean(dice)


if __name__ == "__main__":
    ignore_index = -100
    key0, key1 = jax.random.split(jax.random.PRNGKey(0))

    def make_inputs(B, C, nlat, nlon, key):
        k_prd, k_tar, k_mask = jax.random.split(key, 3)
        prd = jax.random.normal(k_prd, (B, C, nlat, nlon), dtype=jnp.float32)
        tar = jax.random.randint(k_tar, (B, nlat, nlon), 0, C, dtype=jnp.int32)
        drop = jax.random.uniform(k_mask, (B, nlat, nlon)) < 0.1
        tar = jnp.where(drop, jnp.int32(ignore_index), tar)
        quad = get_quadrature_weights(nlat, nlon, grid="equiangular")
        return prd, tar, quad

    ok = True

    def check(name, got, want, rtol=1e-5, atol=1e-6):
        global ok
        got = np.asarray(jax.block_until_ready(got))
        want = np.asarray(want)
        if not np.allclose(got, want, rtol=rtol, atol=atol):
            ok = False
            print(f"MISMATCH {name}: kernel={got} ref={want}")

    # Case 1: f32 logits, auto tile size (single full tile).
    prd, tar, quad = make_inputs(2, 4, 16, 16, key0)
    for mode in ("micro", "macro"):
        for smooth in (0.0, 1.0):
            got = dice_loss_s2(prd, tar, quad, smooth=smooth,
                               ignore_index=ignore_index, mode=mode)
            want = _reference(prd, tar, quad, smooth, ignore_index, mode)
            check(f"f32 mode={mode} smooth={smooth}", got, want)

    # Case 2: ragged latitude tiling (nlat=19, TL=8 -> last tile has 3 valid rows).
    prd2, tar2, quad2 = make_inputs(2, 4, 19, 16, key1)
    for mode in ("micro", "macro"):
        got = dice_loss_s2(prd2, tar2, quad2, smooth=1.0,
                           ignore_index=ignore_index, mode=mode, tile_lat=8)
        want = _reference(prd2, tar2, quad2, 1.0, ignore_index, mode)
        check(f"ragged mode={mode}", got, want)

    # Case 3: per-class weights.
    w = jnp.asarray([0.1, 0.2, 0.3, 0.4], jnp.float32)
    for mode in ("micro", "macro"):
        got = dice_loss_s2(prd, tar, quad, smooth=0.0,
                           ignore_index=ignore_index, mode=mode, weight=w)
        want = _reference(prd, tar, quad, 0.0, ignore_index, mode, weight=w)
        check(f"weighted mode={mode}", got, want)

    # Case 4: bf16 logits (kernel upcasts per channel plane).
    prd_bf = prd.astype(jnp.bfloat16)
    got = dice_loss_s2(prd_bf, tar, quad, smooth=1.0,
                       ignore_index=ignore_index, mode="micro")
    want = _reference(prd_bf.astype(jnp.float32), tar, quad, 1.0,
                      ignore_index, "micro")
    check("bf16 micro", got, want, rtol=1e-4, atol=1e-6)

    if ok:
        print("KERNEL_OK")
</pallas_src>

<mosaic_0001>
module attributes {stable_mosaic.version = 11 : i64} {
  func.func @_dice_partial_kernel(%arg0: i32, %arg1: i32, %arg2: memref<1x4x16x16xf32, #tpu.memory_space<vmem>>, %arg3: memref<1x16x16xi32, #tpu.memory_space<vmem>>, %arg4: memref<16x1xf32, #tpu.memory_space<vmem>>, %arg5: memref<1x1x1x4xf32, #tpu.memory_space<vmem>>, %arg6: memref<1x1x1x4xf32, #tpu.memory_space<vmem>>) attributes {dimension_semantics = [#tpu.dimension_semantics<parallel>, #tpu.dimension_semantics<parallel>], iteration_bounds = array<i64: 2, 1>, scalar_prefetch = 0 : i64, scratch_operands = 0 : i64, tpu.core_type = #tpu.core_type<tc>, window_params = [{transform_indices = @transform_0, window_bounds = array<i64: 1, 4, 16, 16>}, {transform_indices = @transform_1, window_bounds = array<i64: 1, 16, 16>}, {transform_indices = @transform_2, window_bounds = array<i64: 16, 1>}, {transform_indices = @transform_3, window_bounds = array<i64: 1, 1, 1, 4>}, {transform_indices = @transform_4, window_bounds = array<i64: 1, 1, 1, 4>}]} {
    %c0 = arith.constant 0 : index
    %c0_0 = arith.constant 0 : index
    %c0_1 = arith.constant 0 : index
    %0 = vector.load %arg3[%c0, %c0_0, %c0_1] : memref<1x16x16xi32, #tpu.memory_space<vmem>>, vector<1x16x16xi32>
    %1 = vector.shape_cast %0 : vector<1x16x16xi32> to vector<16x16xi32>
    %c0_2 = arith.constant 0 : index
    %c0_3 = arith.constant 0 : index
    %2 = vector.load %arg4[%c0_2, %c0_3] : memref<16x1xf32, #tpu.memory_space<vmem>>, vector<16x1xf32>
    %c-100_i32 = arith.constant -100 : i32
    %3 = vector.broadcast %c-100_i32 : i32 to vector<16x16xi32>
    %4 = arith.cmpi ne, %1, %3 : vector<16x16xi32>
    %c0_i32 = arith.constant 0 : i32
    %5 = vector.broadcast %c0_i32 : i32 to vector<16x16xi32>
    %6 = arith.select %4, %1, %5 : vector<16x16xi1>, vector<16x16xi32>
    %c0_4 = arith.constant 0 : index
    %c0_5 = arith.constant 0 : index
    %c0_6 = arith.constant 0 : index
    %c0_7 = arith.constant 0 : index
    %7 = vector.load %arg2[%c0_4, %c0_5, %c0_6, %c0_7] : memref<1x4x16x16xf32, #tpu.memory_space<vmem>>, vector<1x1x16x16xf32>
    %8 = vector.shape_cast %7 : vector<1x1x16x16xf32> to vector<16x16xf32>
    %c0_8 = arith.constant 0 : index
    %c1 = arith.constant 1 : index
    %c0_9 = arith.constant 0 : index
    %c0_10 = arith.constant 0 : index
    %9 = vector.load %arg2[%c0_8, %c1, %c0_9, %c0_10] : memref<1x4x16x16xf32, #tpu.memory_space<vmem>>, vector<1x1x16x16xf32>
    %10 = vector.shape_cast %9 : vector<1x1x16x16xf32> to vector<16x16xf32>
    %11 = arith.maximumf %8, %10 : vector<16x16xf32>
    %c0_11 = arith.constant 0 : index
    %c2 = arith.constant 2 : index
    %c0_12 = arith.constant 0 : index
    %c0_13 = arith.constant 0 : index
    %12 = vector.load %arg2[%c0_11, %c2, %c0_12, %c0_13] : memref<1x4x16x16xf32, #tpu.memory_space<vmem>>, vector<1x1x16x16xf32>
    %13 = vector.shape_cast %12 : vector<1x1x16x16xf32> to vector<16x16xf32>
    %14 = arith.maximumf %11, %13 : vector<16x16xf32>
    %c0_14 = arith.constant 0 : index
    %c3 = arith.constant 3 : index
    %c0_15 = arith.constant 0 : index
    %c0_16 = arith.constant 0 : index
    %15 = vector.load %arg2[%c0_14, %c3, %c0_15, %c0_16] : memref<1x4x16x16xf32, #tpu.memory_space<vmem>>, vector<1x1x16x16xf32>
    %16 = vector.shape_cast %15 : vector<1x1x16x16xf32> to vector<16x16xf32>
    %17 = arith.maximumf %14, %16 : vector<16x16xf32>
    %c0_17 = arith.constant 0 : index
    %c0_18 = arith.constant 0 : index
    %c0_19 = arith.constant 0 : index
    %c0_20 = arith.constant 0 : index
    %18 = vector.load %arg2[%c0_17, %c0_18, %c0_19, %c0_20] : memref<1x4x16x16xf32, #tpu.memory_space<vmem>>, vector<1x1x16x16xf32>
    %19 = vector.shape_cast %18 : vector<1x1x16x16xf32> to vector<16x16xf32>
    %20 = arith.subf %19, %17 : vector<16x16xf32>
    %21 = math.exp %20 : vector<16x16xf32>
    %c0_21 = arith.constant 0 : index
    %c1_22 = arith.constant 1 : index
    %c0_23 = arith.constant 0 : index
    %c0_24 = arith.constant 0 : index
    %22 = vector.load %arg2[%c0_21, %c1_22, %c0_23, %c0_24] : memref<1x4x16x16xf32, #tpu.memory_space<vmem>>, vector<1x1x16x16xf32>
    %23 = vector.shape_cast %22 : vector<1x1x16x16xf32> to vector<16x16xf32>
    %24 = arith.subf %23, %17 : vector<16x16xf32>
    %25 = math.exp %24 : vector<16x16xf32>
    %26 = arith.addf %21, %25 : vector<16x16xf32>
    %c0_25 = arith.constant 0 : index
    %c2_26 = arith.constant 2 : index
    %c0_27 = arith.constant 0 : index
    %c0_28 = arith.constant 0 : index
    %27 = vector.load %arg2[%c0_25, %c2_26, %c0_27, %c0_28] : memref<1x4x16x16xf32, #tpu.memory_space<vmem>>, vector<1x1x16x16xf32>
    %28 = vector.shape_cast %27 : vector<1x1x16x16xf32> to vector<16x16xf32>
    %29 = arith.subf %28, %17 : vector<16x16xf32>
    %30 = math.exp %29 : vector<16x16xf32>
    %31 = arith.addf %26, %30 : vector<16x16xf32>
    %c0_29 = arith.constant 0 : index
    %c3_30 = arith.constant 3 : index
    %c0_31 = arith.constant 0 : index
    %c0_32 = arith.constant 0 : index
    %32 = vector.load %arg2[%c0_29, %c3_30, %c0_31, %c0_32] : memref<1x4x16x16xf32, #tpu.memory_space<vmem>>, vector<1x1x16x16xf32>
    %33 = vector.shape_cast %32 : vector<1x1x16x16xf32> to vector<16x16xf32>
    %34 = arith.subf %33, %17 : vector<16x16xf32>
    %35 = math.exp %34 : vector<16x16xf32>
    %36 = arith.addf %31, %35 : vector<16x16xf32>
    %37 = math.log %36 : vector<16x16xf32>
    %38 = arith.addf %17, %37 : vector<16x16xf32>
    %39 = tpu.iota {dimensions = array<i32: 1>} : vector<16x4xi32>
    %cst = arith.constant 0.000000e+00 : f32
    %40 = vector.broadcast %cst : f32 to vector<16x4xf32>
    %cst_33 = arith.constant 0.000000e+00 : f32
    %41 = vector.broadcast %cst_33 : f32 to vector<16x4xf32>
    %c0_34 = arith.constant 0 : index
    %c0_35 = arith.constant 0 : index
    %c0_36 = arith.constant 0 : index
    %c0_37 = arith.constant 0 : index
    %42 = vector.load %arg2[%c0_34, %c0_35, %c0_36, %c0_37] : memref<1x4x16x16xf32, #tpu.memory_space<vmem>>, vector<1x1x16x16xf32>
    %43 = vector.shape_cast %42 : vector<1x1x16x16xf32> to vector<16x16xf32>
    %44 = arith.subf %43, %38 : vector<16x16xf32>
    %45 = math.exp %44 : vector<16x16xf32>
    %cst_38 = arith.constant 0.000000e+00 : f32
    %46 = vector.broadcast %cst_38 : f32 to vector<16x16xf32>
    %47 = arith.select %4, %45, %46 : vector<16x16xi1>, vector<16x16xf32>
    %c0_i32_39 = arith.constant 0 : i32
    %48 = vector.broadcast %c0_i32_39 : i32 to vector<16x16xi32>
    %49 = arith.cmpi eq, %6, %48 : vector<16x16xi32>
    %cst_40 = arith.constant 1.000000e+00 : f32
    %cst_41 = arith.constant 0.000000e+00 : f32
    %50 = vector.broadcast %cst_40 : f32 to vector<16x16xf32>
    %51 = vector.broadcast %cst_41 : f32 to vector<16x16xf32>
    %52 = arith.select %49, %50, %51 : vector<16x16xi1>, vector<16x16xf32>
    %cst_42 = arith.constant 0.000000e+00 : f32
    %53 = vector.broadcast %cst_42 : f32 to vector<16x16xf32>
    %54 = arith.select %49, %47, %53 : vector<16x16xi1>, vector<16x16xf32>
    %cst_43 = arith.constant dense<0.000000e+00> : vector<16xf32>
    %55 = vector.multi_reduction <add>, %54, %cst_43 [1] : vector<16x16xf32> to vector<16xf32>
    %56 = vector.shape_cast %55 : vector<16xf32> to vector<16x1xf32>
    %57 = arith.addf %47, %52 : vector<16x16xf32>
    %cst_44 = arith.constant dense<0.000000e+00> : vector<16xf32>
    %58 = vector.multi_reduction <add>, %57, %cst_44 [1] : vector<16x16xf32> to vector<16xf32>
    %59 = vector.shape_cast %58 : vector<16xf32> to vector<16x1xf32>
    %c0_i32_45 = arith.constant 0 : i32
    %60 = vector.broadcast %c0_i32_45 : i32 to vector<16x4xi32>
    %61 = arith.cmpi eq, %39, %60 : vector<16x4xi32>
    %62 = vector.shape_cast %56 : vector<16x1xf32> to vector<16x1xf32>
    %63 = vector.broadcast %62 : vector<16x1xf32> to vector<16x4xf32>
    %64 = arith.select %61, %63, %40 : vector<16x4xi1>, vector<16x4xf32>
    %c0_i32_46 = arith.constant 0 : i32
    %65 = vector.broadcast %c0_i32_46 : i32 to vector<16x4xi32>
    %66 = arith.cmpi eq, %39, %65 : vector<16x4xi32>
    %67 = vector.shape_cast %59 : vector<16x1xf32> to vector<16x1xf32>
    %68 = vector.broadcast %67 : vector<16x1xf32> to vector<16x4xf32>
    %69 = arith.select %66, %68, %41 : vector<16x4xi1>, vector<16x4xf32>
    %c0_47 = arith.constant 0 : index
    %c1_48 = arith.constant 1 : index
    %c0_49 = arith.constant 0 : index
    %c0_50 = arith.constant 0 : index
    %70 = vector.load %arg2[%c0_47, %c1_48, %c0_49, %c0_50] : memref<1x4x16x16xf32, #tpu.memory_space<vmem>>, vector<1x1x16x16xf32>
    %71 = vector.shape_cast %70 : vector<1x1x16x16xf32> to vector<16x16xf32>
    %72 = arith.subf %71, %38 : vector<16x16xf32>
    %73 = math.exp %72 : vector<16x16xf32>
    %cst_51 = arith.constant 0.000000e+00 : f32
    %74 = vector.broadcast %cst_51 : f32 to vector<16x16xf32>
    %75 = arith.select %4, %73, %74 : vector<16x16xi1>, vector<16x16xf32>
    %c1_i32 = arith.constant 1 : i32
    %76 = vector.broadcast %c1_i32 : i32 to vector<16x16xi32>
    %77 = arith.cmpi eq, %6, %76 : vector<16x16xi32>
    %cst_52 = arith.constant 1.000000e+00 : f32
    %cst_53 = arith.constant 0.000000e+00 : f32
    %78 = vector.broadcast %cst_52 : f32 to vector<16x16xf32>
    %79 = vector.broadcast %cst_53 : f32 to vector<16x16xf32>
    %80 = arith.select %77, %78, %79 : vector<16x16xi1>, vector<16x16xf32>
    %cst_54 = arith.constant 0.000000e+00 : f32
    %81 = vector.broadcast %cst_54 : f32 to vector<16x16xf32>
    %82 = arith.select %77, %75, %81 : vector<16x16xi1>, vector<16x16xf32>
    %cst_55 = arith.constant dense<0.000000e+00> : vector<16xf32>
    %83 = vector.multi_reduction <add>, %82, %cst_55 [1] : vector<16x16xf32> to vector<16xf32>
    %84 = vector.shape_cast %83 : vector<16xf32> to vector<16x1xf32>
    %85 = arith.addf %75, %80 : vector<16x16xf32>
    %cst_56 = arith.constant dense<0.000000e+00> : vector<16xf32>
    %86 = vector.multi_reduction <add>, %85, %cst_56 [1] : vector<16x16xf32> to vector<16xf32>
    %87 = vector.shape_cast %86 : vector<16xf32> to vector<16x1xf32>
    %c1_i32_57 = arith.constant 1 : i32
    %88 = vector.broadcast %c1_i32_57 : i32 to vector<16x4xi32>
    %89 = arith.cmpi eq, %39, %88 : vector<16x4xi32>
    %90 = vector.shape_cast %84 : vector<16x1xf32> to vector<16x1xf32>
    %91 = vector.broadcast %90 : vector<16x1xf32> to vector<16x4xf32>
    %92 = arith.select %89, %91, %64 : vector<16x4xi1>, vector<16x4xf32>
    %c1_i32_58 = arith.constant 1 : i32
    %93 = vector.broadcast %c1_i32_58 : i32 to vector<16x4xi32>
    %94 = arith.cmpi eq, %39, %93 : vector<16x4xi32>
    %95 = vector.shape_cast %87 : vector<16x1xf32> to vector<16x1xf32>
    %96 = vector.broadcast %95 : vector<16x1xf32> to vector<16x4xf32>
    %97 = arith.select %94, %96, %69 : vector<16x4xi1>, vector<16x4xf32>
    %c0_59 = arith.constant 0 : index
    %c2_60 = arith.constant 2 : index
    %c0_61 = arith.constant 0 : index
    %c0_62 = arith.constant 0 : index
    %98 = vector.load %arg2[%c0_59, %c2_60, %c0_61, %c0_62] : memref<1x4x16x16xf32, #tpu.memory_space<vmem>>, vector<1x1x16x16xf32>
    %99 = vector.shape_cast %98 : vector<1x1x16x16xf32> to vector<16x16xf32>
    %100 = arith.subf %99, %38 : vector<16x16xf32>
    %101 = math.exp %100 : vector<16x16xf32>
    %cst_63 = arith.constant 0.000000e+00 : f32
    %102 = vector.broadcast %cst_63 : f32 to vector<16x16xf32>
    %103 = arith.select %4, %101, %102 : vector<16x16xi1>, vector<16x16xf32>
    %c2_i32 = arith.constant 2 : i32
    %104 = vector.broadcast %c2_i32 : i32 to vector<16x16xi32>
    %105 = arith.cmpi eq, %6, %104 : vector<16x16xi32>
    %cst_64 = arith.constant 1.000000e+00 : f32
    %cst_65 = arith.constant 0.000000e+00 : f32
    %106 = vector.broadcast %cst_64 : f32 to vector<16x16xf32>
    %107 = vector.broadcast %cst_65 : f32 to vector<16x16xf32>
    %108 = arith.select %105, %106, %107 : vector<16x16xi1>, vector<16x16xf32>
    %cst_66 = arith.constant 0.000000e+00 : f32
    %109 = vector.broadcast %cst_66 : f32 to vector<16x16xf32>
    %110 = arith.select %105, %103, %109 : vector<16x16xi1>, vector<16x16xf32>
    %cst_67 = arith.constant dense<0.000000e+00> : vector<16xf32>
    %111 = vector.multi_reduction <add>, %110, %cst_67 [1] : vector<16x16xf32> to vector<16xf32>
    %112 = vector.shape_cast %111 : vector<16xf32> to vector<16x1xf32>
    %113 = arith.addf %103, %108 : vector<16x16xf32>
    %cst_68 = arith.constant dense<0.000000e+00> : vector<16xf32>
    %114 = vector.multi_reduction <add>, %113, %cst_68 [1] : vector<16x16xf32> to vector<16xf32>
    %115 = vector.shape_cast %114 : vector<16xf32> to vector<16x1xf32>
    %c2_i32_69 = arith.constant 2 : i32
    %116 = vector.broadcast %c2_i32_69 : i32 to vector<16x4xi32>
    %117 = arith.cmpi eq, %39, %116 : vector<16x4xi32>
    %118 = vector.shape_cast %112 : vector<16x1xf32> to vector<16x1xf32>
    %119 = vector.broadcast %118 : vector<16x1xf32> to vector<16x4xf32>
    %120 = arith.select %117, %119, %92 : vector<16x4xi1>, vector<16x4xf32>
    %c2_i32_70 = arith.constant 2 : i32
    %121 = vector.broadcast %c2_i32_70 : i32 to vector<16x4xi32>
    %122 = arith.cmpi eq, %39, %121 : vector<16x4xi32>
    %123 = vector.shape_cast %115 : vector<16x1xf32> to vector<16x1xf32>
    %124 = vector.broadcast %123 : vector<16x1xf32> to vector<16x4xf32>
    %125 = arith.select %122, %124, %97 : vector<16x4xi1>, vector<16x4xf32>
    %c0_71 = arith.constant 0 : index
    %c3_72 = arith.constant 3 : index
    %c0_73 = arith.constant 0 : index
    %c0_74 = arith.constant 0 : index
    %126 = vector.load %arg2[%c0_71, %c3_72, %c0_73, %c0_74] : memref<1x4x16x16xf32, #tpu.memory_space<vmem>>, vector<1x1x16x16xf32>
    %127 = vector.shape_cast %126 : vector<1x1x16x16xf32> to vector<16x16xf32>
    %128 = arith.subf %127, %38 : vector<16x16xf32>
    %129 = math.exp %128 : vector<16x16xf32>
    %cst_75 = arith.constant 0.000000e+00 : f32
    %130 = vector.broadcast %cst_75 : f32 to vector<16x16xf32>
    %131 = arith.select %4, %129, %130 : vector<16x16xi1>, vector<16x16xf32>
    %c3_i32 = arith.constant 3 : i32
    %132 = vector.broadcast %c3_i32 : i32 to vector<16x16xi32>
    %133 = arith.cmpi eq, %6, %132 : vector<16x16xi32>
    %cst_76 = arith.constant 1.000000e+00 : f32
    %cst_77 = arith.constant 0.000000e+00 : f32
    %134 = vector.broadcast %cst_76 : f32 to vector<16x16xf32>
    %135 = vector.broadcast %cst_77 : f32 to vector<16x16xf32>
    %136 = arith.select %133, %134, %135 : vector<16x16xi1>, vector<16x16xf32>
    %cst_78 = arith.constant 0.000000e+00 : f32
    %137 = vector.broadcast %cst_78 : f32 to vector<16x16xf32>
    %138 = arith.select %133, %131, %137 : vector<16x16xi1>, vector<16x16xf32>
    %cst_79 = arith.constant dense<0.000000e+00> : vector<16xf32>
    %139 = vector.multi_reduction <add>, %138, %cst_79 [1] : vector<16x16xf32> to vector<16xf32>
    %140 = vector.shape_cast %139 : vector<16xf32> to vector<16x1xf32>
    %141 = arith.addf %131, %136 : vector<16x16xf32>
    %cst_80 = arith.constant dense<0.000000e+00> : vector<16xf32>
    %142 = vector.multi_reduction <add>, %141, %cst_80 [1] : vector<16x16xf32> to vector<16xf32>
    %143 = vector.shape_cast %142 : vector<16xf32> to vector<16x1xf32>
    %c3_i32_81 = arith.constant 3 : i32
    %144 = vector.broadcast %c3_i32_81 : i32 to vector<16x4xi32>
    %145 = arith.cmpi eq, %39, %144 : vector<16x4xi32>
    %146 = vector.shape_cast %140 : vector<16x1xf32> to vector<16x1xf32>
    %147 = vector.broadcast %146 : vector<16x1xf32> to vector<16x4xf32>
    %148 = arith.select %145, %147, %120 : vector<16x4xi1>, vector<16x4xf32>
    %c3_i32_82 = arith.constant 3 : i32
    %149 = vector.broadcast %c3_i32_82 : i32 to vector<16x4xi32>
    %150 = arith.cmpi eq, %39, %149 : vector<16x4xi32>
    %151 = vector.shape_cast %143 : vector<16x1xf32> to vector<16x1xf32>
    %152 = vector.broadcast %151 : vector<16x1xf32> to vector<16x4xf32>
    %153 = arith.select %150, %152, %125 : vector<16x4xi1>, vector<16x4xf32>
    %154 = vector.broadcast %2 : vector<16x1xf32> to vector<16x4xf32>
    %155 = arith.mulf %148, %154 : vector<16x4xf32>
    %cst_83 = arith.constant dense<0.000000e+00> : vector<4xf32>
    %156 = vector.multi_reduction <add>, %155, %cst_83 [0] : vector<16x4xf32> to vector<4xf32>
    %157 = vector.shape_cast %156 : vector<4xf32> to vector<1x4xf32>
    %158 = vector.shape_cast %157 : vector<1x4xf32> to vector<1x1x1x4xf32>
    %c0_84 = arith.constant 0 : index
    %c0_85 = arith.constant 0 : index
    %c0_86 = arith.constant 0 : index
    %c0_87 = arith.constant 0 : index
    %159 = vector.load %arg5[%c0_84, %c0_85, %c0_86, %c0_87] : memref<1x1x1x4xf32, #tpu.memory_space<vmem>>, vector<1x1x1x4xf32>
    tpu.vector_store %arg5[%c0_84, %c0_85, %c0_86, %c0_87], %158 {strides = array<i32>} : memref<1x1x1x4xf32, #tpu.memory_space<vmem>>, vector<1x1x1x4xf32>,
    %160 = vector.broadcast %2 : vector<16x1xf32> to vector<16x4xf32>
    %161 = arith.mulf %153, %160 : vector<16x4xf32>
    %cst_88 = arith.constant dense<0.000000e+00> : vector<4xf32>
    %162 = vector.multi_reduction <add>, %161, %cst_88 [0] : vector<16x4xf32> to vector<4xf32>
    %163 = vector.shape_cast %162 : vector<4xf32> to vector<1x4xf32>
    %164 = vector.shape_cast %163 : vector<1x4xf32> to vector<1x1x1x4xf32>
    %c0_89 = arith.constant 0 : index
    %c0_90 = arith.constant 0 : index
    %c0_91 = arith.constant 0 : index
    %c0_92 = arith.constant 0 : index
    %165 = vector.load %arg6[%c0_89, %c0_90, %c0_91, %c0_92] : memref<1x1x1x4xf32, #tpu.memory_space<vmem>>, vector<1x1x1x4xf32>
    tpu.vector_store %arg6[%c0_89, %c0_90, %c0_91, %c0_92], %164 {strides = array<i32>} : memref<1x1x1x4xf32, #tpu.memory_space<vmem>>, vector<1x1x1x4xf32>,
    return
  }
  func.func @transform_0(%arg0: i32, %arg1: i32) -> (i32, i32, i32, i32) {
    %c0_i32 = arith.constant 0 : i32
    %c0_i32_0 = arith.constant 0 : i32
    %c0_i32_1 = arith.constant 0 : i32
    return %arg0, %c0_i32, %arg1, %c0_i32_0 : i32, i32, i32, i32
  }
  func.func @transform_1(%arg0: i32, %arg1: i32) -> (i32, i32, i32) {
    %c0_i32 = arith.constant 0 : i32
    %c0_i32_0 = arith.constant 0 : i32
    return %arg0, %arg1, %c0_i32 : i32, i32, i32
  }
  func.func @transform_2(%arg0: i32, %arg1: i32) -> (i32, i32) {
    %c0_i32 = arith.constant 0 : i32
    %c0_i32_0 = arith.constant 0 : i32
    return %arg1, %c0_i32 : i32, i32
  }
  func.func @transform_3(%arg0: i32, %arg1: i32) -> (i32, i32, i32, i32) {
    %c0_i32 = arith.constant 0 : i32
    %c0_i32_0 = arith.constant 0 : i32
    %c0_i32_1 = arith.constant 0 : i32
    return %arg0, %arg1, %c0_i32, %c0_i32_0 : i32, i32, i32, i32
  }
  func.func @transform_4(%arg0: i32, %arg1: i32) -> (i32, i32, i32, i32) {
    %c0_i32 = arith.constant 0 : i32
    %c0_i32_0 = arith.constant 0 : i32
    %c0_i32_1 = arith.constant 0 : i32
    return %arg0, %arg1, %c0_i32, %c0_i32_0 : i32, i32, i32, i32
  }
}

</mosaic_0001>

<llo_original>
// kernel: tpu_custom_call.1
$region0: #{tpu_custom_call.1}
  #allocation0 [shape = 'u32[]', space=smem, size = 0x4, offset = 0x4, fixed_abs, tag = 'smem constant byte address 0x4 - core index']
  #allocation1 [shape = 'u32[144,128]{1,0:T(1,128)}', space=vmem, size = 0x12000, scoped, tag = 'internal scratch']
  %s0 = inlined_call_operand.hbm [shape: f32[2,4,16,16], index: 0, kind: input, shape index: {}]
  %s1 = inlined_call_operand.hbm [shape: s32[2,16,16], index: 1, kind: input, shape index: {}]
  %s2 = inlined_call_operand.vmem [shape: f32[16,1], index: 2, kind: input, shape index: {}]
  %s3 = inlined_call_operand.hbm [shape: f32[2,1,1,4], index: 3, kind: output, shape index: {0}]
  %s4 = inlined_call_operand.hbm [shape: f32[2,1,1,4], index: 4, kind: output, shape index: {1}]
  %5 = xla_tuple %s3, %s4
  %s6 = sld [smem:[#allocation0]]
  $region61: #{tpu_custom_call.1} parent=0
    _
  %s8 = ssub.s32 1, %s6
  %s9 = scalar_select 0, %s8, %s6
  $region1: #{tpu_custom_call.1} parent=0
    #allocation2 [shape = 'u8[65536]{0}', space=vmem, size = 0x10000, scoped, tag = 'input window, operand 0']
    #allocation3 [shape = 's32[2]{0}', space=sflag, size = 0x8, scoped, tag = 'scoped memory for tpu_custom_call.1']
    #allocation4 [shape = 's32[2]{0}', space=sflag, size = 0x8, scoped, tag = 'scoped memory for tpu_custom_call.1']
    #allocation5 [shape = 'u8[16384]{0}', space=vmem, size = 0x4000, scoped, tag = 'input window, operand 1']
    #allocation6 [shape = 's32[2]{0}', space=sflag, size = 0x8, scoped, tag = 'scoped memory for tpu_custom_call.1']
    #allocation7 [shape = 'u8[1024]{0}', space=vmem, size = 0x400, scoped, tag = 'output window, operand 0']
    #allocation8 [shape = 'u8[1024]{0}', space=vmem, size = 0x400, scoped, tag = 'output window, operand 1']
    #allocation9 [shape = 's32[2]{0}', space=sflag, size = 0x8, scoped, tag = 'scoped memory for tpu_custom_call.1']
    %10 = vsyncpa [#allocation3], 0
    %s11 = scalar_lea.sflag [#allocation3], 1
    %12 = vsyncpa %s11, 0
    %13 = vsyncpa [#allocation6], 0
    %s14 = scalar_lea.sflag [#allocation6], 1
    %15 = vsyncpa %s14, 0
    %16 = vsyncpa [#allocation4], 0
    %s17 = scalar_lea.sflag [#allocation4], 1
    %18 = vsyncpa %s17, 0
    %19 = vsyncpa [#allocation9], 0
    %s20 = scalar_lea.sflag [#allocation9], 1
    %21 = vsyncpa %s20, 0
    loop: start=0, step=1, limit=4
    $region2: #{tpu_custom_call.1} parent=1 // loop_pre_header
      _
    $region3: #{tpu_custom_call.1} parent=1 // loop_header
      %s23 = sphi 0, %s27
      %p24 = scmp.ge.s32.totalorder %s23, 4
      %s30 = sphi 0, %s42
      %s31 = sphi 0, %s38
      %s32 = sphi 0, %s30
      %s33 = sphi 0, %s31
      %s34 = sphi 0, %s32
      %s35 = sphi 0, %s33
      %s47 = sphi 0, %s49
      %s50 = sphi 0, %s47
      %s51 = sphi 0, %s50
      %s67 = sphi 0, %s51
      %s75 = sphi 0, %s77
      %s78 = sphi 0, %s75
      %s79 = sphi 0, %s78
      %s95 = sphi 0, %s79
      %s101 = sphi 0, %s103
      %s104 = sphi 0, %s101
      %s105 = sphi 0, %s104
      %s121 = sphi 0, %s105
      %s129 = sphi 0, %s131
      %s132 = sphi 0, %s129
      %s133 = sphi 0, %s132
      %s149 = sphi 0, %s133
      %s157 = sphi 0, %s159
      %s160 = sphi 0, %s157
      %s161 = sphi 0, %s160
      %s177 = sphi 0, %s161
    $region4: #{tpu_custom_call.1} parent=1 // loop_header_branch
      %26 = sbr.rel (%p24) target = $region8
    $region5: #{tpu_custom_call.1} parent=1 // loop_body
      %s28 = ssub.s32 %s23, 1
      %s29 = ssub.s32 %s23, 2
      %s36 = sadd.s32 1, %s31
      %p37 = scmp.ge.s32.totalorder %s36, 1
      %s38 = scalar_select %p37, 0, %s36
      %s39 = sadd.s32 1, %s30
      %s40 = scalar_select %p37, %s39, %s30
      %p41 = scmp.ge.s32.totalorder %s40, 2
      %s42 = scalar_select %p41, 0, %s40
      %s43 = ssub.s32 %s30, %s42
      %s44 = ssub.s32 %s31, %s38
      %s45 = sor.u32 %s43, %s44
      %p46 = scmp.eq.s32.totalorder %s45, 0
      %s48 = sadd.s32 %s47, 1
      %s49 = scalar_select %p46, %s47, %s48
      %p52 = pneg %p46
      %p53 = scmp.eq.s32.totalorder %s23, 1
      %p54 = por %p52, %p53
      %p55 = scmp.ne.s32.totalorder %s47, %s50
      %p56 = scmp.eq.s32.totalorder %s23, 0
      %p57 = por %p55, %p56
      %p58 = scmp.ne.s32.totalorder %s47, %s50
      %p59 = scmp.eq.s32.totalorder %s28, 1
      %p60 = por %p58, %p59
      %p61 = scmp.ne.s32.totalorder %s50, %s51
      %p62 = scmp.eq.s32.totalorder %s28, 0
      %p63 = por %p61, %p62
      %p64 = scmp.ne.s32.totalorder %s50, %s51
      %p65 = scmp.eq.s32.totalorder %s29, 1
      %p66 = por %p64, %p65
      %p68 = scmp.ne.s32.totalorder %s51, %s67
      %p69 = scmp.eq.s32.totalorder %s29, 0
      %p70 = por %p68, %p69
      %s71 = ssub.s32 %s30, %s42
      %s72 = ssub.s32 %s31, %s38
      %s73 = sor.u32 %s71, %s72
      %p74 = scmp.eq.s32.totalorder %s73, 0
      %s76 = sadd.s32 %s75, 1
      %s77 = scalar_select %p74, %s75, %s76
      %p80 = pneg %p74
      %p81 = scmp.eq.s32.totalorder %s23, 1
      %p82 = por %p80, %p81
      %p83 = scmp.ne.s32.totalorder %s75, %s78
      %p84 = scmp.eq.s32.totalorder %s23, 0
      %p85 = por %p83, %p84
      %p86 = scmp.ne.s32.totalorder %s75, %s78
      %p87 = scmp.eq.s32.totalorder %s28, 1
      %p88 = por %p86, %p87
      %p89 = scmp.ne.s32.totalorder %s78, %s79
      %p90 = scmp.eq.s32.totalorder %s28, 0
      %p91 = por %p89, %p90
      %p92 = scmp.ne.s32.totalorder %s78, %s79
      %p93 = scmp.eq.s32.totalorder %s29, 1
      %p94 = por %p92, %p93
      %p96 = scmp.ne.s32.totalorder %s79, %s95
      %p97 = scmp.eq.s32.totalorder %s29, 0
      %p98 = por %p96, %p97
      %s99 = ssub.s32 %s31, %s38
      %p100 = scmp.eq.s32.totalorder %s99, 0
      %s102 = sadd.s32 %s101, 1
      %s103 = scalar_select %p100, %s101, %s102
      %p106 = pneg %p100
      %p107 = scmp.eq.s32.totalorder %s23, 1
      %p108 = por %p106, %p107
      %p109 = scmp.ne.s32.totalorder %s101, %s104
      %p110 = scmp.eq.s32.totalorder %s23, 0
      %p111 = por %p109, %p110
      %p112 = scmp.ne.s32.totalorder %s101, %s104
      %p113 = scmp.eq.s32.totalorder %s28, 1
      %p114 = por %p112, %p113
      %p115 = scmp.ne.s32.totalorder %s104, %s105
      %p116 = scmp.eq.s32.totalorder %s28, 0
      %p117 = por %p115, %p116
      %p118 = scmp.ne.s32.totalorder %s104, %s105
      %p119 = scmp.eq.s32.totalorder %s29, 1
      %p120 = por %p118, %p119
      %p122 = scmp.ne.s32.totalorder %s105, %s121
      %p123 = scmp.eq.s32.totalorder %s29, 0
      %p124 = por %p122, %p123
      %s125 = ssub.s32 %s30, %s42
      %s126 = ssub.s32 %s31, %s38
      %s127 = sor.u32 %s125, %s126
      %p128 = scmp.eq.s32.totalorder %s127, 0
      %s130 = sadd.s32 %s129, 1
      %s131 = scalar_select %p128, %s129, %s130
      %p134 = pneg %p128
      %p135 = scmp.eq.s32.totalorder %s23, 1
      %p136 = por %p134, %p135
      %p137 = scmp.ne.s32.totalorder %s129, %s132
      %p138 = scmp.eq.s32.totalorder %s23, 0
      %p139 = por %p137, %p138
      %p140 = scmp.ne.s32.totalorder %s129, %s132
      %p141 = scmp.eq.s32.totalorder %s28, 1
      %p142 = por %p140, %p141
      %p143 = scmp.ne.s32.totalorder %s132, %s133
      %p144 = scmp.eq.s32.totalorder %s28, 0
      %p145 = por %p143, %p144
      %p146 = scmp.ne.s32.totalorder %s132, %s133
      %p147 = scmp.eq.s32.totalorder %s29, 1
      %p148 = por %p146, %p147
      %p150 = scmp.ne.s32.totalorder %s133, %s149
      %p151 = scmp.eq.s32.totalorder %s29, 0
      %p152 = por %p150, %p151
      %s153 = ssub.s32 %s30, %s42
      %s154 = ssub.s32 %s31, %s38
      %s155 = sor.u32 %s153, %s154
      %p156 = scmp.eq.s32.totalorder %s155, 0
      %s158 = sadd.s32 %s157, 1
      %s159 = scalar_select %p156, %s157, %s158
      %p162 = pneg %p156
      %p163 = scmp.eq.s32.totalorder %s23, 1
      %p164 = por %p162, %p163
      %p165 = scmp.ne.s32.totalorder %s157, %s160
      %p166 = scmp.eq.s32.totalorder %s23, 0
      %p167 = por %p165, %p166
      %p168 = scmp.ne.s32.totalorder %s157, %s160
      %p169 = scmp.eq.s32.totalorder %s28, 1
      %p170 = por %p168, %p169
      %p171 = scmp.ne.s32.totalorder %s160, %s161
      %p172 = scmp.eq.s32.totalorder %s28, 0
      %p173 = por %p171, %p172
      %p174 = scmp.ne.s32.totalorder %s160, %s161
      %p175 = scmp.eq.s32.totalorder %s29, 1
      %p176 = por %p174, %p175
      %p178 = scmp.ne.s32.totalorder %s161, %s177
      %p179 = scmp.eq.s32.totalorder %s29, 0
      %p180 = por %p178, %p179
      %p181 = scmp.le.s32.totalorder 1, %s23
      %p182 = scmp.lt.s32.totalorder %s23, 3
      %p183 = pnand %p181, %p182
      %p184 = pneg %p183
      // Predicated region
      $region9: #{tpu_custom_call.1} parent=5 // pred_check
        _
      $region10: #{tpu_custom_call.1} parent=5 // pred_check_branch
        %186 = sbr.rel (%p183) target = $region12
      $region11: #{tpu_custom_call.1} parent=5 // pred_region
        %s187 = ssub.s32 %s23, 1
        // Predicated region
        $region13: #{tpu_custom_call.1} parent=11 // pred_check
          %p188 = pneg %p117
        $region14: #{tpu_custom_call.1} parent=11 // pred_check_branch
          %190 = sbr.rel (%p188) target = $region16
        $region15: #{tpu_custom_call.1} parent=11 // pred_region
          %s191 = smul.u32 2, %s33
          %p192 = scmp.lt.s32.totalorder %s191, 1
          %s193 = scalar_select %p192, %s191, 1
          %s194 = smul.addr %s193, 8
          %s195 = scalar_lea.vmem %s2, %s194
          %s196 = smul.u32 2, %s33
        $region16: #{tpu_custom_call.1} parent=11 // pred_fallthru
          _
      $region12: #{tpu_custom_call.1} parent=5 // pred_fallthru
        _
      %p197 = scmp.lt.s32.totalorder %s23, 2
      // Predicated region
      $region17: #{tpu_custom_call.1} parent=5 // pred_check
        %p198 = pneg %p197
      $region18: #{tpu_custom_call.1} parent=5 // pred_check_branch
        %200 = sbr.rel (%p198) target = $region20
      $region19: #{tpu_custom_call.1} parent=5 // pred_region
        // Predicated region
        $region21: #{tpu_custom_call.1} parent=19 // pred_check
          %p201 = pneg %p57
        $region22: #{tpu_custom_call.1} parent=19 // pred_check_branch
          %203 = sbr.rel (%p201) target = $region24
        $region23: #{tpu_custom_call.1} parent=19 // pred_region
          %s204 = sand.u32 %s47, 1
          %s205 = scalar_lea.sflag [#allocation3], %s204
          %s206 = sand.u32 %s47, 1
          %s207 = smul.addr %s206, 64
          %s208 = scalar_lea.vmem [#allocation2], %s207
          %s209 = smul.u32 2, %s31
          %s211 = ssub.s32 1024, 1024
          %212 = vsyncadd %s205, %s211
          %s213 = smul.addr %s30, 8
          %s214 = sadd.s32 %s209, %s213
          %s215 = smul.addr %s214, 128
          %s216 = scalar_lea.hbm %s0, %s215
          %s217 = sshll.u32 %s208, 4
          %s218 = int_to_ptr.vmem [resolvable:$true] %s217
          %223 = dma.hbm_to_vmem [thread:$0]  %s216, 1024, %s218, %s205, 128, 128, 8
        $region24: #{tpu_custom_call.1} parent=19 // pred_fallthru
          _
        // Predicated region
        $region25: #{tpu_custom_call.1} parent=19 // pred_check
          %p224 = pneg %p85
        $region26: #{tpu_custom_call.1} parent=19 // pred_check_branch
          %226 = sbr.rel (%p224) target = $region28
        $region27: #{tpu_custom_call.1} parent=19 // pred_region
          %s227 = sand.u32 %s75, 1
          %s228 = scalar_lea.sflag [#allocation6], %s227
          %s229 = sand.u32 %s75, 1
          %s230 = smul.addr %s229, 16
          %s231 = scalar_lea.vmem [#allocation5], %s230
          %s232 = smul.u32 2, %s31
          %s234 = ssub.s32 256, 256
          %235 = vsyncadd %s228, %s234
          %s236 = smul.addr %s30, 2
          %s237 = sadd.s32 %s232, %s236
          %s238 = smul.addr %s237, 128
          %s239 = scalar_lea.hbm %s1, %s238
          %s240 = sshll.u32 %s231, 4
          %s241 = int_to_ptr.vmem [resolvable:$true] %s240
          %246 = dma.hbm_to_vmem [thread:$0]  %s239, 256, %s241, %s228, 128, 128, 8
        $region28: #{tpu_custom_call.1} parent=19 // pred_fallthru
          _
      $region20: #{tpu_custom_call.1} parent=5 // pred_fallthru
        _
      %p247 = scmp.le.s32.totalorder 1, %s23
      %p248 = scmp.lt.s32.totalorder %s23, 3
      %p249 = pnand %p247, %p248
      %p250 = pneg %p249
      // Predicated region
      $region29: #{tpu_custom_call.1} parent=5 // pred_check
        _
      $region30: #{tpu_custom_call.1} parent=5 // pred_check_branch
        %252 = sbr.rel (%p249) target = $region32
      $region31: #{tpu_custom_call.1} parent=5 // pred_region
        %s253 = ssub.s32 %s23, 1
        %s254 = sand.u32 %s50, 1
        %s255 = scalar_lea.sflag [#allocation3], %s254
        %s256 = sand.u32 %s50, 1
        %s257 = smul.addr %s256, 64
        %s258 = scalar_lea.vmem [#allocation2], %s257
        // Predicated region
        $region33: #{tpu_custom_call.1} parent=31 // pred_check
          %p259 = pneg %p63
        $region34: #{tpu_custom_call.1} parent=31 // pred_check_branch
          %261 = sbr.rel (%p259) target = $region36
        $region35: #{tpu_custom_call.1} parent=31 // pred_region
          %262 = dma.done %s255, 1024
        $region36: #{tpu_custom_call.1} parent=31 // pred_fallthru
          _
        %s263 = sand.u32 %s78, 1
        %s264 = scalar_lea.sflag [#allocation6], %s263
        %s265 = sand.u32 %s78, 1
        %s266 = smul.addr %s265, 16
        %s267 = scalar_lea.vmem [#allocation5], %s266
        // Predicated region
        $region37: #{tpu_custom_call.1} parent=31 // pred_check
          %p268 = pneg %p91
        $region38: #{tpu_custom_call.1} parent=31 // pred_check_branch
          %270 = sbr.rel (%p268) target = $region40
        $region39: #{tpu_custom_call.1} parent=31 // pred_region
          %271 = dma.done %s264, 256
        $region40: #{tpu_custom_call.1} parent=31 // pred_fallthru
          _
        %s272 = sand.u32 %s50, 1
        %s273 = scalar_lea.sflag [#allocation3], %s272
        %s274 = sand.u32 %s50, 1
        %s275 = smul.addr %s274, 64
        %s276 = scalar_lea.vmem [#allocation2], %s275
        %p277 = pneg %p63
        %p278 = pneg %p60
        %s279 = sand.u32 %s78, 1
        %s280 = scalar_lea.sflag [#allocation6], %s279
        %s281 = sand.u32 %s78, 1
        %s282 = smul.addr %s281, 16
        %s283 = scalar_lea.vmem [#allocation5], %s282
        %p284 = pneg %p91
        %p285 = pneg %p88
        %s286 = smul.u32 2, %s33
        %p287 = scmp.lt.s32.totalorder %s286, 1
        %s288 = scalar_select %p287, %s286, 1
        %s289 = smul.addr %s288, 8
        %s290 = scalar_lea.vmem %s2, %s289
        %p291 = pneg %p117
        %p292 = pneg %p114
        %p293 = pneg %p145
        %p294 = pneg %p142
        %s295 = sand.u32 %s132, 1
        %s296 = scalar_lea.sflag [#allocation4], %s295
        %s297 = sand.u32 %s132, 1
        %s298 = scalar_lea.vmem [#allocation7], %s297
        %p299 = pneg %p173
        %p300 = pneg %p170
        %s301 = sand.u32 %s160, 1
        %s302 = scalar_lea.sflag [#allocation9], %s301
        %s303 = sand.u32 %s160, 1
        %s304 = scalar_lea.vmem [#allocation8], %s303
        %s305 = smul.u32 2, %s33
        %s306 = smul.u32 2, %s33
        %s307 = smul.u32 2, %s33
        %p308 = scmp.lt.s32.totalorder %s307, 1
        %s309 = scalar_select %p308, %s307, 1
        %s310 = smul.addr %s309, 8
        %s311 = scalar_lea.vmem %s2, %s310
        %s312 = smul.u32 2, %s33
        %v313 = vld [vmem:[%s267] sm:$0xff]
        %v314 = vld [vmem:[%s267 + $0x8] sm:$0xff]
        %v315 = vld [vmem:[%s311] sm:$0xff]
        %v316 = vld [vmem:[%s311 + $0x8] sm:$0xff]
        %vm317 = vcmp.ne.s32.totalorder %v313, 4294967196
        %vm318 = vcmp.ne.s32.totalorder %v314, 4294967196
        %v319 = vsel %vm317, %v313, 0
        %v320 = vsel %vm318, %v314, 0
        %v321 = vld [vmem:[%s258] sm:$0xff]
        %v322 = vld [vmem:[%s258 + $0x8] sm:$0xff]
        %s323 = scalar_lea.vmem %s258, 16 [#allocation2]
        %v324 = vld [vmem:[%s323] sm:$0xff]
        %v325 = vld [vmem:[%s323 + $0x8] sm:$0xff]
        %v326 = vmax.f32 %v321, %v324
        %v327 = vmax.f32 %v322, %v325
        %s328 = scalar_lea.vmem %s258, 32 [#allocation2]
        %v329 = vld [vmem:[%s328] sm:$0xff]
        %v330 = vld [vmem:[%s328 + $0x8] sm:$0xff]
        %v331 = vmax.f32 %v326, %v329
        %v332 = vmax.f32 %v327, %v330
        %s333 = scalar_lea.vmem %s258, 48 [#allocation2]
        %v334 = vld [vmem:[%s333] sm:$0xff]
        %v335 = vld [vmem:[%s333 + $0x8] sm:$0xff]
        %v336 = vmax.f32 %v331, %v334
        %v337 = vmax.f32 %v332, %v335
        %v338 = vsub.f32 %v321, %v336
        %v339 = vsub.f32 %v322, %v337
        %v340 = vmul.f32 %v338, 1.442695
        %v341 = vpow.pop %v340
        %v342 = vmul.f32 %v339, 1.442695
        %v343 = vpow.pop %v342
        %v344 = vsub.f32 %v324, %v336
        %v345 = vsub.f32 %v325, %v337
        %v346 = vmul.f32 %v344, 1.442695
        %v347 = vpow.pop %v346
        %v348 = vmul.f32 %v345, 1.442695
        %v349 = vpow.pop %v348
        %v350 = vadd.f32 %v341, %v347
        %v351 = vadd.f32 %v343, %v349
        %v352 = vsub.f32 %v329, %v336
        %v353 = vsub.f32 %v330, %v337
        %v354 = vmul.f32 %v352, 1.442695
        %v355 = vpow.pop %v354
        %v356 = vmul.f32 %v353, 1.442695
        %v357 = vpow.pop %v356
        %v358 = vadd.f32 %v350, %v355
        %v359 = vadd.f32 %v351, %v357
        %v360 = vsub.f32 %v334, %v336
        %v361 = vsub.f32 %v335, %v337
        %v362 = vmul.f32 %v360, 1.442695
        %v363 = vpow.pop %v362
        %v364 = vmul.f32 %v361, 1.442695
        %v365 = vpow.pop %v364
        %v366 = vadd.f32 %v358, %v363
        %v367 = vadd.f32 %v359, %v365
        %v368 = vlog2.pop %v366
        %v369 = vmul.f32 %v368, 0.6931472
        %v370 = vlog2.pop %v367
        %v371 = vmul.f32 %v370, 0.6931472
        %v372 = vadd.f32 %v336, %v369
        %v373 = vadd.f32 %v337, %v371
        %v374 = vlaneseq
        %v375 = vand.u32 %v374, 127
        %v376 = vsub.f32 %v321, %v372
        %v377 = vsub.f32 %v322, %v373
        %v378 = vmul.f32 %v376, 1.442695
        %v379 = vpow.pop %v378
        %v380 = vmul.f32 %v377, 1.442695
        %v381 = vpow.pop %v380
        %v382 = vsel %vm317, %v379, 0.0
        %v383 = vsel %vm318, %v381, 0.0
        %vm384 = vcmp.eq.s32.totalorder %v319, 0
        %vm385 = vcmp.eq.s32.totalorder %v320, 0
        %v386 = vsel %vm384, 1.0, 0.0
        %v387 = vsel %vm385, 1.0, 0.0
        %v388 = vsel %vm384, %v382, 0.0
        %v389 = vsel %vm385, %v383, 0.0
        %vm390 = vcmask 130048
        %v391 = vsel %vm390, %v388, 0.0
        %392 = vadd.xlane.f32.xlu0 %v391
        %v393 = vpop.xlane.xlu0 %392
        %v394 = vsel %vm390, %v389, 0.0
        %395 = vadd.xlane.f32.xlu0 %v394
        %v396 = vpop.xlane.xlu0 %395
        %v397 = vadd.f32 %v382, %v386
        %v398 = vadd.f32 %v383, %v387
        %v399 = vsel %vm390, %v397, 0.0
        %400 = vadd.xlane.f32.xlu0 %v399
        %v401 = vpop.xlane.xlu0 %400
        %v402 = vsel %vm390, %v398, 0.0
        %403 = vadd.xlane.f32.xlu0 %v402
        %v404 = vpop.xlane.xlu0 %403
        %vm405 = vcmp.eq.s32.totalorder %v375, 0
        %v406 = vsel %vm405, %v393, 0.0
        %v407 = vsel %vm405, %v396, 0.0
        %v408 = vsel %vm405, %v401, 0.0
        %v409 = vsel %vm405, %v404, 0.0
        %v410 = vsub.f32 %v324, %v372
        %v411 = vsub.f32 %v325, %v373
        %v412 = vmul.f32 %v410, 1.442695
        %v413 = vpow.pop %v412
        %v414 = vmul.f32 %v411, 1.442695
        %v415 = vpow.pop %v414
        %v416 = vsel %vm317, %v413, 0.0
        %v417 = vsel %vm318, %v415, 0.0
        %vm418 = vcmp.eq.s32.totalorder %v319, 1
        %vm419 = vcmp.eq.s32.totalorder %v320, 1
        %v420 = vsel %vm418, 1.0, 0.0
        %v421 = vsel %vm419, 1.0, 0.0
        %v422 = vsel %vm418, %v416, 0.0
        %v423 = vsel %vm419, %v417, 0.0
        %v424 = vsel %vm390, %v422, 0.0
        %425 = vadd.xlane.f32.xlu0 %v424
        %v426 = vpop.xlane.xlu0 %425
        %v427 = vsel %vm390, %v423, 0.0
        %428 = vadd.xlane.f32.xlu0 %v427
        %v429 = vpop.xlane.xlu0 %428
        %v430 = vadd.f32 %v416, %v420
        %v431 = vadd.f32 %v417, %v421
        %v432 = vsel %vm390, %v430, 0.0
        %433 = vadd.xlane.f32.xlu0 %v432
        %v434 = vpop.xlane.xlu0 %433
        %v435 = vsel %vm390, %v431, 0.0
        %436 = vadd.xlane.f32.xlu0 %v435
        %v437 = vpop.xlane.xlu0 %436
        %vm438 = vcmp.eq.s32.totalorder %v375, 1
        %v439 = vsel %vm438, %v426, %v406
        %v440 = vsel %vm438, %v429, %v407
        %v441 = vsel %vm438, %v434, %v408
        %v442 = vsel %vm438, %v437, %v409
        %v443 = vsub.f32 %v329, %v372
        %v444 = vsub.f32 %v330, %v373
        %v445 = vmul.f32 %v443, 1.442695
        %v446 = vpow.pop %v445
        %v447 = vmul.f32 %v444, 1.442695
        %v448 = vpow.pop %v447
        %v449 = vsel %vm317, %v446, 0.0
        %v450 = vsel %vm318, %v448, 0.0
        %vm451 = vcmp.eq.s32.totalorder %v319, 2
        %vm452 = vcmp.eq.s32.totalorder %v320, 2
        %v453 = vsel %vm451, 1.0, 0.0
        %v454 = vsel %vm452, 1.0, 0.0
        %v455 = vsel %vm451, %v449, 0.0
        %v456 = vsel %vm452, %v450, 0.0
        %v457 = vsel %vm390, %v455, 0.0
        %458 = vadd.xlane.f32.xlu0 %v457
        %v459 = vpop.xlane.xlu0 %458
        %v460 = vsel %vm390, %v456, 0.0
        %461 = vadd.xlane.f32.xlu0 %v460
        %v462 = vpop.xlane.xlu0 %461
        %v463 = vadd.f32 %v449, %v453
        %v464 = vadd.f32 %v450, %v454
        %v465 = vsel %vm390, %v463, 0.0
        %466 = vadd.xlane.f32.xlu0 %v465
        %v467 = vpop.xlane.xlu0 %466
        %v468 = vsel %vm390, %v464, 0.0
        %469 = vadd.xlane.f32.xlu0 %v468
        %v470 = vpop.xlane.xlu0 %469
        %vm471 = vcmp.eq.s32.totalorder %v375, 2
        %v472 = vsel %vm471, %v459, %v439
        %v473 = vsel %vm471, %v462, %v440
        %v474 = vsel %vm471, %v467, %v441
        %v475 = vsel %vm471, %v470, %v442
        %v476 = vsub.f32 %v334, %v372
        %v477 = vsub.f32 %v335, %v373
        %v478 = vmul.f32 %v476, 1.442695
        %v479 = vpow.pop %v478
        %v480 = vmul.f32 %v477, 1.442695
        %v481 = vpow.pop %v480
        %v482 = vsel %vm317, %v479, 0.0
        %v483 = vsel %vm318, %v481, 0.0
        %vm484 = vcmp.eq.s32.totalorder %v319, 3
        %vm485 = vcmp.eq.s32.totalorder %v320, 3
        %v486 = vsel %vm484, 1.0, 0.0
        %v487 = vsel %vm485, 1.0, 0.0
        %v488 = vsel %vm484, %v482, 0.0
        %v489 = vsel %vm485, %v483, 0.0
        %v490 = vsel %vm390, %v488, 0.0
        %491 = vadd.xlane.f32.xlu0 %v490
        %v492 = vpop.xlane.xlu0 %491
        %v493 = vsel %vm390, %v489, 0.0
        %494 = vadd.xlane.f32.xlu0 %v493
        %v495 = vpop.xlane.xlu0 %494
        %v496 = vadd.f32 %v482, %v486
        %v497 = vadd.f32 %v483, %v487
        %v498 = vsel %vm390, %v496, 0.0
        %499 = vadd.xlane.f32.xlu0 %v498
        %v500 = vpop.xlane.xlu0 %499
        %v501 = vsel %vm390, %v497, 0.0
        %502 = vadd.xlane.f32.xlu0 %v501
        %v503 = vpop.xlane.xlu0 %502
        %vm504 = vcmp.eq.s32.totalorder %v375, 3
        %v505 = vsel %vm504, %v492, %v472
        %v506 = vsel %vm504, %v495, %v473
        %v507 = vsel %vm504, %v500, %v474
        %v508 = vsel %vm504, %v503, %v475
        %510 = vset.pattern.permute.xlu0 0
        %511 = vperm.xlu0 %510, %v315
        %v512 = vpop.permute.xlu0 %511
        %515 = vset.pattern.permute.xlu0 0
        %516 = vperm.xlu0 %515, %v316
        %v517 = vpop.permute.xlu0 %516
        %v519 = vmul.f32 %v505, %v512
        %v520 = vmul.f32 %v506, %v517
        %vm521 = vcmask 31744
        %v522 = vsel %vm521, %v519, 0.0
        %v523 = vsel %vm521, %v520, 0.0
        %v524 = vadd.f32 %v522, %v523
        %v525 = vrot.slane %v524, 4
        %v526 = vadd.f32 %v524, %v525
        %v527 = vrot.slane %v526, 2
        %v528 = vadd.f32 %v526, %v527
        %v529 = vrot.slane %v528, 1
        %v530 = vadd.f32 %v528, %v529
        %vm531 = vcmask 24576
        %532 = vst.msk [vmem:[%s298] sm:$0x1] %vm531, %v530
        %v533 = vmul.f32 %v507, %v512
        %v534 = vmul.f32 %v508, %v517
        %v535 = vsel %vm521, %v533, 0.0
        %v536 = vsel %vm521, %v534, 0.0
        %v537 = vadd.f32 %v535, %v536
        %v538 = vrot.slane %v537, 4
        %v539 = vadd.f32 %v537, %v538
        %v540 = vrot.slane %v539, 2
        %v541 = vadd.f32 %v539, %v540
        %v542 = vrot.slane %v541, 1
        %v543 = vadd.f32 %v541, %v542
        %544 = vst.msk [vmem:[%s304] sm:$0x1] %vm531, %v543
        %s545 = sand.u32 %s132, 1
        %s546 = scalar_lea.sflag [#allocation4], %s545
        %s547 = sand.u32 %s132, 1
        %s548 = scalar_lea.vmem [#allocation7], %s547
        %s549 = sand.u32 %s160, 1
        %s550 = scalar_lea.sflag [#allocation9], %s549
        %s551 = sand.u32 %s160, 1
        %s552 = scalar_lea.vmem [#allocation8], %s551
        // Predicated region
        $region41: #{tpu_custom_call.1} parent=31 // pred_check
          %p553 = pneg %p142
        $region42: #{tpu_custom_call.1} parent=31 // pred_check_branch
          %555 = sbr.rel (%p553) target = $region44
        $region43: #{tpu_custom_call.1} parent=31 // pred_region
          %s557 = ssub.s32 16, 16
          %558 = vsyncadd %s546, %s557
          %s559 = sadd.s32 %s33, %s32
          %s560 = smul.addr %s559, 16
          %s561 = scalar_lea.hbm %s3, %s560
          %s563 = sshll.u32 %s548, 4
          %s564 = int_to_ptr.vmem [resolvable:$true] %s563
          %566 = dma.vmem_to_hbm [thread:$0]  %s564, 16, %s561, %s546
        $region44: #{tpu_custom_call.1} parent=31 // pred_fallthru
          _
        // Predicated region
        $region45: #{tpu_custom_call.1} parent=31 // pred_check
          %p567 = pneg %p170
        $region46: #{tpu_custom_call.1} parent=31 // pred_check_branch
          %569 = sbr.rel (%p567) target = $region48
        $region47: #{tpu_custom_call.1} parent=31 // pred_region
          %s571 = ssub.s32 16, 16
          %572 = vsyncadd %s550, %s571
          %s573 = sadd.s32 %s33, %s32
          %s574 = smul.addr %s573, 16
          %s575 = scalar_lea.hbm %s4, %s574
          %s577 = sshll.u32 %s552, 4
          %s578 = int_to_ptr.vmem [resolvable:$true] %s577
          %580 = dma.vmem_to_hbm [thread:$0]  %s578, 16, %s575, %s550
        $region48: #{tpu_custom_call.1} parent=31 // pred_fallthru
          _
      $region32: #{tpu_custom_call.1} parent=5 // pred_fallthru
        _
      %p581 = scmp.le.s32.totalorder 2, %s23
      // Predicated region
      $region49: #{tpu_custom_call.1} parent=5 // pred_check
        %p582 = pneg %p581
      $region50: #{tpu_custom_call.1} parent=5 // pred_check_branch
        %584 = sbr.rel (%p582) target = $region52
      $region51: #{tpu_custom_call.1} parent=5 // pred_region
        %s585 = ssub.s32 %s23, 2
        // Predicated region
        $region53: #{tpu_custom_call.1} parent=51 // pred_check
          %p586 = pneg %p148
        $region54: #{tpu_custom_call.1} parent=51 // pred_check_branch
          %588 = sbr.rel (%p586) target = $region56
        $region55: #{tpu_custom_call.1} parent=51 // pred_region
          %s589 = sand.u32 %s133, 1
          %s590 = scalar_lea.sflag [#allocation4], %s589
          %s591 = sand.u32 %s133, 1
          %s592 = scalar_lea.vmem [#allocation7], %s591
          %593 = dma.done %s590, 16
        $region56: #{tpu_custom_call.1} parent=51 // pred_fallthru
          _
        // Predicated region
        $region57: #{tpu_custom_call.1} parent=51 // pred_check
          %p594 = pneg %p176
        $region58: #{tpu_custom_call.1} parent=51 // pred_check_branch
          %596 = sbr.rel (%p594) target = $region60
        $region59: #{tpu_custom_call.1} parent=51 // pred_region
          %s597 = sand.u32 %s161, 1
          %s598 = scalar_lea.sflag [#allocation9], %s597
          %s599 = sand.u32 %s161, 1
          %s600 = scalar_lea.vmem [#allocation8], %s599
          %601 = dma.done %s598, 16
        $region60: #{tpu_custom_call.1} parent=51 // pred_fallthru
          _
      $region52: #{tpu_custom_call.1} parent=5 // pred_fallthru
        _
    $region6: #{tpu_custom_call.1} parent=1 // loop_footer
      %s27 = sadd.s32 1, %s23
    $region7: #{tpu_custom_call.1} parent=1 // loop_footer_branch
      %22 = sbr.rel target = $region3
    $region8: #{tpu_custom_call.1} parent=1 // loop_exit
      _
    %602 = vsyncpa [#allocation3], 1
    %s603 = scalar_lea.sflag [#allocation3], 1
    %604 = vsyncpa %s603, 1
    %605 = vsyncpa [#allocation6], 1
    %s606 = scalar_lea.sflag [#allocation6], 1
    %607 = vsyncpa %s606, 1
    %608 = vsyncpa [#allocation4], 1
    %s609 = scalar_lea.sflag [#allocation4], 1
    %610 = vsyncpa %s609, 1
    %611 = vsyncpa [#allocation9], 1
    %s612 = scalar_lea.sflag [#allocation9], 1
    %613 = vsyncpa %s612, 1

</llo_original>
